<compile_context>
chip_gen: v6e
topology: v6e:2x2x1
jax: 0.10.0
libtpu: 0.0.40
codegen_flags: <defaults>
</compile_context>

<pallas_src>
import functools

import jax
import jax.numpy as jnp
from jax.experimental import pallas as pl
from jax.experimental.pallas import tpu as pltpu


def _mlp_kernel(x_ref, w1_ref, b1_ref, w2_ref, b2_ref, w3_ref, b3_ref, o_ref):
    # x_ref: (tm, input_dim) tile of flattened (seq*batch) rows.
    # Weights arrive already in the MXU operand dtype (bf16 on the fast path);
    # cast the activation tile to match, accumulate in f32 on the MXU.
    x = x_ref[...].astype(w1_ref.dtype)

    h1 = jnp.dot(x, w1_ref[...], preferred_element_type=jnp.float32) + b1_ref[...]
    h1 = jnp.maximum(h1, 0.0)
    # Dropout(p) in eval mode == identity (no scaling, no masking).

    h2 = jnp.dot(h1.astype(w2_ref.dtype), w2_ref[...],
                 preferred_element_type=jnp.float32) + b2_ref[...]
    h2 = jnp.maximum(h2, 0.0)
    # Dropout(p) in eval mode == identity.

    y = jnp.dot(h2.astype(w3_ref.dtype), w3_ref[...],
                preferred_element_type=jnp.float32) + b3_ref[...]
    o_ref[...] = y.astype(o_ref.dtype)


def _round_up(x, m):
    return (x + m - 1) // m * m


@functools.partial(jax.jit, static_argnames=("tm", "use_bf16"))
def score_t_layer(x, params, *, tm=256, use_bf16=True):
    """x: (seq, batch, input_dim) -> (batch, seq, target_dim)."""
    w1, b1, w2, b2, w3, b3 = params
    S, B, Din = x.shape
    H = w1.shape[1]
    T = w3.shape[1]
    M = S * B

    mm_dtype = jnp.bfloat16 if use_bf16 else jnp.float32
    w1c = w1.astype(mm_dtype)
    w2c = w2.astype(mm_dtype)
    w3c = w3.astype(mm_dtype)

    # Biases kept 2D (1, dim) in f32 so the blocks satisfy TPU layout rules and
    # the add happens on the f32 accumulator.
    b1r = b1.reshape(1, H).astype(jnp.float32)
    b2r = b2.reshape(1, H).astype(jnp.float32)
    b3r = b3.reshape(1, T).astype(jnp.float32)

    # Flatten (seq, batch) rows -> 2D row matrix (free, row-major contiguous).
    x2d = x.reshape(M, Din)

    # Large row tile (amortizes ~0.35 us/grid-step overhead, feeds the MXU
    # 256 rows at a time), clamped for small problems; keep it a multiple of 8.
    tm_eff = max(8, min(tm, _round_up(M, 8)))
    grid = (pl.cdiv(M, tm_eff),)  # ragged tail handled by Pallas edge masking

    flops = 2 * M * (Din * H + H * H + H * T)
    bytes_accessed = (
        M * Din * x.dtype.itemsize                                   # x
        + (Din * H + H * H + H * T) * jnp.dtype(mm_dtype).itemsize   # weights
        + (2 * H + T) * 4                                            # biases
        + M * T * x.dtype.itemsize                                   # output
    )

    y2d = pl.pallas_call(
        _mlp_kernel,
        out_shape=jax.ShapeDtypeStruct((M, T), x.dtype),
        grid_spec=pltpu.PrefetchScalarGridSpec(
            num_scalar_prefetch=0,
            grid=grid,
            in_specs=[
                pl.BlockSpec((tm_eff, Din), lambda i: (i, 0)),  # x row tile
                pl.BlockSpec((Din, H), lambda i: (0, 0)),       # W1 (resident)
                pl.BlockSpec((1, H), lambda i: (0, 0)),         # b1
                pl.BlockSpec((H, H), lambda i: (0, 0)),         # W2 (resident)
                pl.BlockSpec((1, H), lambda i: (0, 0)),         # b2
                pl.BlockSpec((H, T), lambda i: (0, 0)),         # W3 (resident)
                pl.BlockSpec((1, T), lambda i: (0, 0)),         # b3
            ],
            out_specs=pl.BlockSpec((tm_eff, T), lambda i: (i, 0)),
        ),
        compiler_params=pltpu.CompilerParams(
            dimension_semantics=("parallel",),
            vmem_limit_bytes=48 * 1024 * 1024,
        ),
        cost_estimate=pl.CostEstimate(
            flops=flops, transcendentals=0, bytes_accessed=bytes_accessed),
    )(x2d, w1c, b1r, w2c, b2r, w3c, b3r)

    # Glue: un-flatten and swap (seq, batch) -> (batch, seq), matching
    # torch.transpose(output, 0, 1).  Traffic is only ~2*M*T bytes (T is small).
    return jnp.swapaxes(y2d.reshape(S, B, T), 0, 1)


def init_params(key, input_dim, hidden_dim, target_dim, dtype=jnp.float32):
    """Deterministic init mimicking nn.Linear default (U(-1/sqrt(fan_in), +))."""
    ks = jax.random.split(key, 6)

    def lin(kw, kb, fan_in, fan_out):
        bound = 1.0 / jnp.sqrt(fan_in)
        # stored as (in, out) so the kernel does x @ W  (== x @ W_torch.T)
        w = jax.random.uniform(kw, (fan_in, fan_out), dtype, -bound, bound)
        b = jax.random.uniform(kb, (fan_out,), dtype, -bound, bound)
        return w, b

    w1, b1 = lin(ks[0], ks[1], input_dim, hidden_dim)
    w2, b2 = lin(ks[2], ks[3], hidden_dim, hidden_dim)
    w3, b3 = lin(ks[4], ks[5], hidden_dim, target_dim)
    return (w1, b1, w2, b2, w3, b3)


if __name__ == "__main__":
    input_dim, hidden_dim, target_dim = 16, 32, 4
    seq, batch = 8, 2

    key = jax.random.PRNGKey(0)
    kx, kp = jax.random.split(key)
    x = jax.random.normal(kx, (seq, batch, input_dim), dtype=jnp.float32)
    params = init_params(kp, input_dim, hidden_dim, target_dim)

    # Fast path (bf16 MXU operands, f32 accumulation) — the default.
    out = score_t_layer(x, params)
    out = jax.block_until_ready(out)

    # Exact f32 path for a tight numerical check of the kernel plumbing.
    out_f32 = jax.block_until_ready(score_t_layer(x, params, use_bf16=False))

    # Reference in plain JAX f32 (eval-mode dropout == identity).
    w1, b1, w2, b2, w3, b3 = params
    h1 = jnp.maximum(x @ w1 + b1, 0.0)
    h2 = jnp.maximum(h1 @ w2 + b2, 0.0)
    ref = jnp.swapaxes(h2 @ w3 + b3, 0, 1)

    assert out.shape == (batch, seq, target_dim), out.shape
    assert out_f32.shape == (batch, seq, target_dim), out_f32.shape
    assert jnp.allclose(out_f32, ref, atol=1e-5, rtol=1e-5)
    assert jnp.allclose(out.astype(jnp.float32), ref, atol=5e-2, rtol=5e-2)
    print("KERNEL_OK")
</pallas_src>

<mosaic_0001>
module attributes {stable_mosaic.version = 11 : i64} {
  func.func @_mlp_kernel(%arg0: i32, %arg1: memref<16x16xf32, #tpu.memory_space<vmem>>, %arg2: memref<16x32xbf16, #tpu.memory_space<vmem>>, %arg3: memref<1x32xf32, #tpu.memory_space<vmem>>, %arg4: memref<32x32xbf16, #tpu.memory_space<vmem>>, %arg5: memref<1x32xf32, #tpu.memory_space<vmem>>, %arg6: memref<32x4xbf16, #tpu.memory_space<vmem>>, %arg7: memref<1x4xf32, #tpu.memory_space<vmem>>, %arg8: memref<16x4xf32, #tpu.memory_space<vmem>>) attributes {dimension_semantics = [#tpu.dimension_semantics<parallel>], iteration_bounds = array<i64: 1>, scalar_prefetch = 0 : i64, scratch_operands = 0 : i64, tpu.core_type = #tpu.core_type<tc>, window_params = [{transform_indices = @transform_0, window_bounds = array<i64: 16, 16>}, {pipeline_mode = #tpu.pipeline_mode<synchronous>, transform_indices = @transform_1, window_bounds = array<i64: 16, 32>}, {pipeline_mode = #tpu.pipeline_mode<synchronous>, transform_indices = @transform_2, window_bounds = array<i64: 1, 32>}, {pipeline_mode = #tpu.pipeline_mode<synchronous>, transform_indices = @transform_3, window_bounds = array<i64: 32, 32>}, {pipeline_mode = #tpu.pipeline_mode<synchronous>, transform_indices = @transform_4, window_bounds = array<i64: 1, 32>}, {pipeline_mode = #tpu.pipeline_mode<synchronous>, transform_indices = @transform_5, window_bounds = array<i64: 32, 4>}, {pipeline_mode = #tpu.pipeline_mode<synchronous>, transform_indices = @transform_6, window_bounds = array<i64: 1, 4>}, {transform_indices = @transform_7, window_bounds = array<i64: 16, 4>}]} {
    %c0 = arith.constant 0 : index
    %c0_0 = arith.constant 0 : index
    %0 = vector.load %arg1[%c0, %c0_0] : memref<16x16xf32, #tpu.memory_space<vmem>>, vector<16x16xf32>
    %1 = arith.truncf %0 : vector<16x16xf32> to vector<16x16xbf16>
    %c0_1 = arith.constant 0 : index
    %c0_2 = arith.constant 0 : index
    %2 = vector.load %arg2[%c0_1, %c0_2] : memref<16x32xbf16, #tpu.memory_space<vmem>>, vector<16x32xbf16>
    %cst = arith.constant dense<0.000000e+00> : vector<16x32xf32>
    %3 = tpu.matmul %1, %2, %cst {dimension_numbers = #tpu.dot_dimension_numbers<[1], [0], [0], [1], [0, 0, 1, 1], [], []>} : vector<16x16xbf16>, vector<16x32xbf16>, vector<16x32xf32> -> vector<16x32xf32>
    %c0_3 = arith.constant 0 : index
    %c0_4 = arith.constant 0 : index
    %4 = vector.load %arg3[%c0_3, %c0_4] : memref<1x32xf32, #tpu.memory_space<vmem>>, vector<1x32xf32>
    %5 = vector.broadcast %4 : vector<1x32xf32> to vector<16x32xf32>
    %6 = arith.addf %3, %5 : vector<16x32xf32>
    %cst_5 = arith.constant 0.000000e+00 : f32
    %7 = vector.broadcast %cst_5 : f32 to vector<16x32xf32>
    %8 = arith.maximumf %6, %7 : vector<16x32xf32>
    %9 = arith.truncf %8 : vector<16x32xf32> to vector<16x32xbf16>
    %c0_6 = arith.constant 0 : index
    %c0_7 = arith.constant 0 : index
    %10 = vector.load %arg4[%c0_6, %c0_7] : memref<32x32xbf16, #tpu.memory_space<vmem>>, vector<32x32xbf16>
    %cst_8 = arith.constant dense<0.000000e+00> : vector<16x32xf32>
    %11 = tpu.matmul %9, %10, %cst_8 {dimension_numbers = #tpu.dot_dimension_numbers<[1], [0], [0], [1], [0, 0, 1, 1], [], []>} : vector<16x32xbf16>, vector<32x32xbf16>, vector<16x32xf32> -> vector<16x32xf32>
    %c0_9 = arith.constant 0 : index
    %c0_10 = arith.constant 0 : index
    %12 = vector.load %arg5[%c0_9, %c0_10] : memref<1x32xf32, #tpu.memory_space<vmem>>, vector<1x32xf32>
    %13 = vector.broadcast %12 : vector<1x32xf32> to vector<16x32xf32>
    %14 = arith.addf %11, %13 : vector<16x32xf32>
    %cst_11 = arith.constant 0.000000e+00 : f32
    %15 = vector.broadcast %cst_11 : f32 to vector<16x32xf32>
    %16 = arith.maximumf %14, %15 : vector<16x32xf32>
    %17 = arith.truncf %16 : vector<16x32xf32> to vector<16x32xbf16>
    %c0_12 = arith.constant 0 : index
    %c0_13 = arith.constant 0 : index
    %18 = vector.load %arg6[%c0_12, %c0_13] : memref<32x4xbf16, #tpu.memory_space<vmem>>, vector<32x4xbf16>
    %cst_14 = arith.constant dense<0.000000e+00> : vector<16x4xf32>
    %19 = tpu.matmul %17, %18, %cst_14 {dimension_numbers = #tpu.dot_dimension_numbers<[1], [0], [0], [1], [0, 0, 1, 1], [], []>} : vector<16x32xbf16>, vector<32x4xbf16>, vector<16x4xf32> -> vector<16x4xf32>
    %c0_15 = arith.constant 0 : index
    %c0_16 = arith.constant 0 : index
    %20 = vector.load %arg7[%c0_15, %c0_16] : memref<1x4xf32, #tpu.memory_space<vmem>>, vector<1x4xf32>
    %21 = vector.broadcast %20 : vector<1x4xf32> to vector<16x4xf32>
    %22 = arith.addf %19, %21 : vector<16x4xf32>
    %c0_17 = arith.constant 0 : index
    %c0_18 = arith.constant 0 : index
    %23 = vector.load %arg8[%c0_17, %c0_18] : memref<16x4xf32, #tpu.memory_space<vmem>>, vector<16x4xf32>
    tpu.vector_store %arg8[%c0_17, %c0_18], %22 {strides = array<i32>} : memref<16x4xf32, #tpu.memory_space<vmem>>, vector<16x4xf32>,
    return
  }
  func.func @transform_0(%arg0: i32) -> (i32, i32) {
    %c0_i32 = arith.constant 0 : i32
    %c0_i32_0 = arith.constant 0 : i32
    return %arg0, %c0_i32 : i32, i32
  }
  func.func @transform_1(%arg0: i32) -> (i32, i32) {
    %c0_i32 = arith.constant 0 : i32
    %c0_i32_0 = arith.constant 0 : i32
    %c0_i32_1 = arith.constant 0 : i32
    return %c0_i32, %c0_i32_0 : i32, i32
  }
  func.func @transform_2(%arg0: i32) -> (i32, i32) {
    %c0_i32 = arith.constant 0 : i32
    %c0_i32_0 = arith.constant 0 : i32
    %c0_i32_1 = arith.constant 0 : i32
    return %c0_i32, %c0_i32_0 : i32, i32
  }
  func.func @transform_3(%arg0: i32) -> (i32, i32) {
    %c0_i32 = arith.constant 0 : i32
    %c0_i32_0 = arith.constant 0 : i32
    %c0_i32_1 = arith.constant 0 : i32
    return %c0_i32, %c0_i32_0 : i32, i32
  }
  func.func @transform_4(%arg0: i32) -> (i32, i32) {
    %c0_i32 = arith.constant 0 : i32
    %c0_i32_0 = arith.constant 0 : i32
    %c0_i32_1 = arith.constant 0 : i32
    return %c0_i32, %c0_i32_0 : i32, i32
  }
  func.func @transform_5(%arg0: i32) -> (i32, i32) {
    %c0_i32 = arith.constant 0 : i32
    %c0_i32_0 = arith.constant 0 : i32
    %c0_i32_1 = arith.constant 0 : i32
    return %c0_i32, %c0_i32_0 : i32, i32
  }
  func.func @transform_6(%arg0: i32) -> (i32, i32) {
    %c0_i32 = arith.constant 0 : i32
    %c0_i32_0 = arith.constant 0 : i32
    %c0_i32_1 = arith.constant 0 : i32
    return %c0_i32, %c0_i32_0 : i32, i32
  }
  func.func @transform_7(%arg0: i32) -> (i32, i32) {
    %c0_i32 = arith.constant 0 : i32
    %c0_i32_0 = arith.constant 0 : i32
    return %arg0, %c0_i32 : i32, i32
  }
}

</mosaic_0001>

<llo_original>
// kernel: score_t_layer.1
$region0: #{score_t_layer.1}
  #allocation0 [shape = 'u32[]', space=smem, size = 0x4, offset = 0x4, fixed_abs, tag = 'smem constant byte address 0x4 - core index']
  #allocation1 [shape = 'u32[144,128]{1,0:T(1,128)}', space=vmem, size = 0x12000, scoped, tag = 'internal scratch']
  %s0 = inlined_call_operand.vmem [shape: f32[16,16], index: 0, kind: input, shape index: {}]
  %s1 = inlined_call_operand.vmem [shape: bf16[16,32], index: 1, kind: input, shape index: {}]
  %s2 = inlined_call_operand.vmem [shape: f32[1,32], index: 2, kind: input, shape index: {}]
  %s3 = inlined_call_operand.vmem [shape: bf16[32,32], index: 3, kind: input, shape index: {}]
  %s4 = inlined_call_operand.vmem [shape: f32[1,32], index: 4, kind: input, shape index: {}]
  %s5 = inlined_call_operand.vmem [shape: bf16[32,4], index: 5, kind: input, shape index: {}]
  %s6 = inlined_call_operand.vmem [shape: f32[1,4], index: 6, kind: input, shape index: {}]
  %s7 = inlined_call_operand.vmem [shape: f32[16,4], index: 7, kind: output, shape index: {}]
  %s8 = sld [smem:[#allocation0]]
  $region38: #{score_t_layer.1} parent=0
    _
  %s10 = ssub.s32 1, %s8
  %s11 = scalar_select 0, %s10, %s8
  // Predicated region
  $region2: #{score_t_layer.1} parent=0 // pred_check
    _
  $region3: #{score_t_layer.1} parent=0 // pred_check_branch
    %13 = sbr.rel (0) target = $region5
  $region4: #{score_t_layer.1} parent=0 // pred_region
    _
  $region5: #{score_t_layer.1} parent=0 // pred_fallthru
    _
  // Predicated region
  $region6: #{score_t_layer.1} parent=0 // pred_check
    _
  $region7: #{score_t_layer.1} parent=0 // pred_check_branch
    %15 = sbr.rel (0) target = $region9
  $region8: #{score_t_layer.1} parent=0 // pred_region
    _
  $region9: #{score_t_layer.1} parent=0 // pred_fallthru
    _
  // Predicated region
  $region10: #{score_t_layer.1} parent=0 // pred_check
    _
  $region11: #{score_t_layer.1} parent=0 // pred_check_branch
    %17 = sbr.rel (0) target = $region13
  $region12: #{score_t_layer.1} parent=0 // pred_region
    _
  $region13: #{score_t_layer.1} parent=0 // pred_fallthru
    _
  // Predicated region
  $region14: #{score_t_layer.1} parent=0 // pred_check
    _
  $region15: #{score_t_layer.1} parent=0 // pred_check_branch
    %19 = sbr.rel (0) target = $region17
  $region16: #{score_t_layer.1} parent=0 // pred_region
    _
  $region17: #{score_t_layer.1} parent=0 // pred_fallthru
    _
  // Predicated region
  $region18: #{score_t_layer.1} parent=0 // pred_check
    _
  $region19: #{score_t_layer.1} parent=0 // pred_check_branch
    %21 = sbr.rel (0) target = $region21
  $region20: #{score_t_layer.1} parent=0 // pred_region
    _
  $region21: #{score_t_layer.1} parent=0 // pred_fallthru
    _
  // Predicated region
  $region22: #{score_t_layer.1} parent=0 // pred_check
    _
  $region23: #{score_t_layer.1} parent=0 // pred_check_branch
    %23 = sbr.rel (0) target = $region25
  $region24: #{score_t_layer.1} parent=0 // pred_region
    _
  $region25: #{score_t_layer.1} parent=0 // pred_fallthru
    _
  // Predicated region
  $region26: #{score_t_layer.1} parent=0 // pred_check
    _
  $region27: #{score_t_layer.1} parent=0 // pred_check_branch
    %25 = sbr.rel (0) target = $region29
  $region28: #{score_t_layer.1} parent=0 // pred_region
    _
  $region29: #{score_t_layer.1} parent=0 // pred_fallthru
    _
  %v27 = vld [vmem:[%s0] sm:$0xff]
  %v28 = vld [vmem:[%s0 + $0x8] sm:$0xff]
  %v29 = vpack.c.bf16 %v28, %v27
  %v30 = vld [vmem:[%s1] sm:$0xf]
  %v31 = vld [vmem:[%s1 + $0x4] sm:$0xf]
  %v32 = vld [vmem:[%s2] sm:$0x1]
  %v34 = vlaneseq
  %v35 = vshrl.u32 %v34, 7
  %v36 = vsub.s32 0, %v35
  %v37 = vrot.slane %v32, %v36
  %v41 = vunpack.c.l.b16 %v30
  %v42 = vunpack.c.l.b16 %v31
  %v43 = vpack.c.b16 %v42, %v41
  %vm45 = vcmask 130048
  %v47 = vsel %vm45, %v29, 0
  %49 = vmatprep.subr.bf16.mxu0 0
  %50 = vmatpush1.bf16.msra.mxu0 0
  %51 = vmatprep.subr.bf16.mxu0 0
  %52 = vmatpush1.bf16.msra.mxu0 0
  %53 = vmatprep.subr.bf16.mxu0 0
  %54 = vmatpush1.bf16.msra.mxu0 0
  %55 = vmatprep.subr.bf16.mxu0 0
  %56 = vmatpush1.bf16.msra.mxu0 0
  %57 = vmatprep.subr.bf16.mxu0 0
  %58 = vmatpush1.bf16.msra.mxu0 0
  %59 = vmatprep.subr.bf16.mxu0 0
  %60 = vmatpush1.bf16.msra.mxu0 0
  %61 = vmatprep.subr.bf16.mxu0 0
  %62 = vmatpush1.bf16.msra.mxu0 0
  %63 = vmatprep.subr.bf16.mxu0 0
  %64 = vmatpush1.bf16.msra.mxu0 %v43
  %65 = vmatprep.subr.bf16.mxu0 0
  %66 = vmatpush2.bf16.msra.mxu0 0
  %67 = vmatprep.subr.bf16.mxu0 0
  %68 = vmatpush2.bf16.msra.mxu0 0
  %69 = vmatprep.subr.bf16.mxu0 0
  %70 = vmatpush2.bf16.msra.mxu0 0
  %71 = vmatprep.subr.bf16.mxu0 0
  %72 = vmatpush2.bf16.msra.mxu0 0
  %73 = vmatprep.subr.bf16.mxu0 0
  %74 = vmatpush2.bf16.msra.mxu0 0
  %75 = vmatprep.subr.bf16.mxu0 0
  %76 = vmatpush2.bf16.msra.mxu0 0
  %77 = vmatprep.subr.bf16.mxu0 0
  %78 = vmatpush2.bf16.msra.mxu0 0
  %79 = vmatprep.subr.bf16.mxu0 0
  %80 = vmatpush2.bf16.msra.mxu0 0
  %81 = vmatprep.mubr.bf16.mxu0 0
  %82 = vmatmul.mubr.bf16.gmra.mxu0 %v47
  %v83 = vpop.f32.mrf.mxu0
  %v84 = vadd.f32 %v37, %v83
  %v85 = vpop.f32.mrf.mxu0
  %v86 = vpop.f32.mrf.mxu0
  %v87 = vadd.f32 %v37, %v86
  %v88 = vpop.f32.mrf.mxu0
  %89 = vdwg.mxu0
  %v90 = vmax.f32 %v84, 0.0
  %v91 = vmax.f32 %v87, 0.0
  %v92 = vpack.c.bf16 %v91, %v90
  %v93 = vld [vmem:[%s3] sm:$0xf]
  %v94 = vld [vmem:[%s3 + $0x4] sm:$0xf]
  %v95 = vld [vmem:[%s3 + $0x8] sm:$0xf]
  %v96 = vld [vmem:[%s3 + $0xc] sm:$0xf]
  %v97 = vld [vmem:[%s4] sm:$0x1]
  %v99 = vlaneseq
  %v100 = vshrl.u32 %v99, 7
  %v101 = vsub.s32 0, %v100
  %v102 = vrot.slane %v97, %v101
  %v108 = vunpack.c.l.b16 %v93
  %v109 = vunpack.c.l.b16 %v94
  %v110 = vunpack.c.l.b16 %v95
  %v111 = vunpack.c.l.b16 %v96
  %v112 = vpack.c.b16 %v109, %v108
  %v113 = vpack.c.b16 %v111, %v110
  %vm116 = vcmask 261120
  %v118 = vsel %vm116, %v92, 0
  %120 = vmatprep.subr.bf16.mxu0 0
  %121 = vmatpush1.bf16.msra.mxu0 0
  %122 = vmatprep.subr.bf16.mxu0 0
  %123 = vmatpush1.bf16.msra.mxu0 0
  %124 = vmatprep.subr.bf16.mxu0 0
  %125 = vmatpush1.bf16.msra.mxu0 0
  %126 = vmatprep.subr.bf16.mxu0 0
  %127 = vmatpush1.bf16.msra.mxu0 0
  %128 = vmatprep.subr.bf16.mxu0 0
  %129 = vmatpush1.bf16.msra.mxu0 0
  %130 = vmatprep.subr.bf16.mxu0 0
  %131 = vmatpush1.bf16.msra.mxu0 0
  %132 = vmatprep.subr.bf16.mxu0 0
  %133 = vmatpush1.bf16.msra.mxu0 %v113
  %134 = vmatprep.subr.bf16.mxu0 0
  %135 = vmatpush1.bf16.msra.mxu0 %v112
  %136 = vmatprep.subr.bf16.mxu0 0
  %137 = vmatpush2.bf16.msra.mxu0 0
  %138 = vmatprep.subr.bf16.mxu0 0
  %139 = vmatpush2.bf16.msra.mxu0 0
  %140 = vmatprep.subr.bf16.mxu0 0
  %141 = vmatpush2.bf16.msra.mxu0 0
  %142 = vmatprep.subr.bf16.mxu0 0
  %143 = vmatpush2.bf16.msra.mxu0 0
  %144 = vmatprep.subr.bf16.mxu0 0
  %145 = vmatpush2.bf16.msra.mxu0 0
  %146 = vmatprep.subr.bf16.mxu0 0
  %147 = vmatpush2.bf16.msra.mxu0 0
  %148 = vmatprep.subr.bf16.mxu0 0
  %149 = vmatpush2.bf16.msra.mxu0 0
  %150 = vmatprep.subr.bf16.mxu0 0
  %151 = vmatpush2.bf16.msra.mxu0 0
  %152 = vmatprep.mubr.bf16.mxu0 0
  %153 = vmatmul.mubr.bf16.gmra.mxu0 %v118
  %v154 = vpop.f32.mrf.mxu0
  %v155 = vadd.f32 %v102, %v154
  %v156 = vpop.f32.mrf.mxu0
  %v157 = vpop.f32.mrf.mxu0
  %v158 = vadd.f32 %v102, %v157
  %v159 = vpop.f32.mrf.mxu0
  %160 = vdwg.mxu0
  %v161 = vmax.f32 %v155, 0.0
  %v162 = vmax.f32 %v158, 0.0
  %v163 = vpack.c.bf16 %v162, %v161
  %v164 = vld [vmem:[%s5] sm:$0xf]
  %v165 = vld [vmem:[%s5 + $0x4] sm:$0xf]
  %v166 = vld [vmem:[%s5 + $0x8] sm:$0xf]
  %v167 = vld [vmem:[%s5 + $0xc] sm:$0xf]
  %v168 = vld [vmem:[%s6] sm:$0x1]
  %v170 = vlaneseq
  %v171 = vshrl.u32 %v170, 7
  %v172 = vsub.s32 0, %v171
  %v173 = vrot.slane %v168, %v172
  %v179 = vunpack.c.l.b16 %v164
  %v180 = vunpack.c.l.b16 %v165
  %v181 = vunpack.c.l.b16 %v166
  %v182 = vunpack.c.l.b16 %v167
  %v183 = vpack.c.b16 %v180, %v179
  %v184 = vpack.c.b16 %v182, %v181
  %v188 = vsel %vm116, %v163, 0
  %190 = vmatprep.subr.bf16.mxu0 0
  %191 = vmatpush1.bf16.msra.mxu0 0
  %192 = vmatprep.subr.bf16.mxu0 0
  %193 = vmatpush1.bf16.msra.mxu0 0
  %194 = vmatprep.subr.bf16.mxu0 0
  %195 = vmatpush1.bf16.msra.mxu0 0
  %196 = vmatprep.subr.bf16.mxu0 0
  %197 = vmatpush1.bf16.msra.mxu0 0
  %198 = vmatprep.subr.bf16.mxu0 0
  %199 = vmatpush1.bf16.msra.mxu0 0
  %200 = vmatprep.subr.bf16.mxu0 0
  %201 = vmatpush1.bf16.msra.mxu0 0
  %202 = vmatprep.subr.bf16.mxu0 0
  %203 = vmatpush1.bf16.msra.mxu0 %v184
  %204 = vmatprep.subr.bf16.mxu0 0
  %205 = vmatpush1.bf16.msra.mxu0 %v183
  %206 = vmatprep.subr.bf16.mxu0 0
  %207 = vmatpush2.bf16.msra.mxu0 0
  %208 = vmatprep.subr.bf16.mxu0 0
  %209 = vmatpush2.bf16.msra.mxu0 0
  %210 = vmatprep.subr.bf16.mxu0 0
  %211 = vmatpush2.bf16.msra.mxu0 0
  %212 = vmatprep.subr.bf16.mxu0 0
  %213 = vmatpush2.bf16.msra.mxu0 0
  %214 = vmatprep.subr.bf16.mxu0 0
  %215 = vmatpush2.bf16.msra.mxu0 0
  %216 = vmatprep.subr.bf16.mxu0 0
  %217 = vmatpush2.bf16.msra.mxu0 0
  %218 = vmatprep.subr.bf16.mxu0 0
  %219 = vmatpush2.bf16.msra.mxu0 0
  %220 = vmatprep.subr.bf16.mxu0 0
  %221 = vmatpush2.bf16.msra.mxu0 0
  %222 = vmatprep.mubr.bf16.mxu0 0
  %223 = vmatmul.mubr.bf16.gmra.mxu0 %v188
  %v224 = vpop.f32.mrf.mxu0
  %v225 = vadd.f32 %v173, %v224
  %v226 = vpop.f32.mrf.mxu0
  %v227 = vpop.f32.mrf.mxu0
  %v228 = vadd.f32 %v173, %v227
  %v229 = vpop.f32.mrf.mxu0
  %230 = vdwg.mxu0
  %vm231 = vcmask 31744
  %232 = vst.msk [vmem:[%s7] sm:$0xff] %vm231, %v225
  %233 = vst.msk [vmem:[%s7 + $0x8] sm:$0xff] %vm231, %v228
  // Predicated region
  $region30: #{score_t_layer.1} parent=0 // pred_check
    _
  $region31: #{score_t_layer.1} parent=0 // pred_check_branch
    %235 = sbr.rel (0) target = $region33
  $region32: #{score_t_layer.1} parent=0 // pred_region
    _
  $region33: #{score_t_layer.1} parent=0 // pred_fallthru
    _
  // Predicated region
  $region34: #{score_t_layer.1} parent=0 // pred_check
    _
  $region35: #{score_t_layer.1} parent=0 // pred_check_branch
    %237 = sbr.rel (0) target = $region37
  $region36: #{score_t_layer.1} parent=0 // pred_region
    _
  $region37: #{score_t_layer.1} parent=0 // pred_fallthru
    _

</llo_original>
